<compile_context>
chip_gen: v7x
topology: tpu7x:2x2x1
jax: 0.10.0
libtpu: 0.0.40
codegen_flags: <defaults>
</compile_context>

<pallas_src>
import functools

import jax
import jax.numpy as jnp
from jax import lax
from jax.experimental import pallas as pl
from jax.experimental.pallas import tpu as pltpu

_LANES = 128
_SUBLANES = 8
_ALIGN = _SUBLANES * _LANES            # 1024-element slab alignment
_CHUNK_ROWS = 1024                     # in-kernel reduction chunk (512 KiB f32 temps)
_TARGET_TILE_BYTES = 4 * 1024 * 1024   # per-input tile target (f32: 8192 rows)
_VMEM_LIMIT_BYTES = 32 * 1024 * 1024   # <= physical VMEM on every generation


def _num_core_splits():
    """2 on megacore v7x (two TensorCores per device), else 1 (v5e/v6e)."""
    try:
        kind = jax.devices()[0].device_kind.lower()
    except Exception:
        return 1
    return 2 if "v7" in kind else 1


def _round_up(x, m):
    return ((x + m - 1) // m) * m


def _pick_block_rows(rows, num_splits, itemsize, max_block_rows=None):
    """Pick (block_rows, chunk_rows): block_rows % chunk_rows == 0, block_rows
    a multiple of 8, block_rows <= rows (rows is a multiple of 8)."""
    rows_per_core = pl.cdiv(rows, num_splits)
    cap = max(_CHUNK_ROWS,
              ((_TARGET_TILE_BYTES // (_LANES * itemsize)) // _CHUNK_ROWS) * _CHUNK_ROWS)
    if max_block_rows is not None:  # test hook to exercise multi-block / ragged paths
        cap = min(cap, max(_SUBLANES, (max_block_rows // _SUBLANES) * _SUBLANES))
    if rows_per_core <= _CHUNK_ROWS or cap <= _CHUNK_ROWS:
        block_rows = min(cap, _round_up(rows_per_core, _SUBLANES))
    else:
        block_rows = min(cap, (rows_per_core // _CHUNK_ROWS) * _CHUNK_ROWS)
    chunk_rows = min(_CHUNK_ROWS, block_rows)
    return block_rows, chunk_rows


def _sse_kernel(yhat_ref, y_ref, out_ref, *, block_rows, chunk_rows,
                inner_steps, rows):
    """Accumulates sum((yhat - y)^2) into a per-core (1, 8, 128) partial block."""
    c = pl.program_id(0)
    i = pl.program_id(1)

    @pl.when(i == 0)
    def _():
        out_ref[...] = jnp.zeros_like(out_ref)

    blk = c * inner_steps + i          # un-clamped logical block index
    block_start = blk * block_rows
    # Ragged last block, or a clamped duplicate block (odd block count with two
    # core splits): those need row masking; interior blocks skip it entirely.
    is_ragged = (block_start + block_rows) > rows
    num_chunks = block_rows // chunk_rows

    def chunk_partial(g, masked):
        off = pl.multiple_of(g * chunk_rows, _SUBLANES)
        yh = yhat_ref[pl.ds(off, chunk_rows), :].astype(jnp.float32)
        yy = y_ref[pl.ds(off, chunk_rows), :].astype(jnp.float32)
        d = yh - yy
        sq = d * d
        if masked:
            row_ids = lax.broadcasted_iota(jnp.int32, sq.shape, 0)
            valid = (block_start + off + row_ids) < rows
            # Select (not multiply-by-mask) so garbage/NaN in OOB rows is discarded.
            sq = jnp.where(valid, sq, jnp.float32(0.0))
        # Fold sublane groups with VPU adds only; the single true cross-lane
        # reduce happens in the wrapper on a tiny (splits, 8, 128) array.
        return jnp.sum(sq.reshape(chunk_rows // _SUBLANES, _SUBLANES, _LANES), axis=0)

    def accumulate(masked):
        def body(g, acc):
            return acc + chunk_partial(g, masked)
        acc = lax.fori_loop(0, num_chunks, body,
                            jnp.zeros((_SUBLANES, _LANES), jnp.float32))
        out_ref[...] += acc[None, :, :]

    @pl.when(jnp.logical_not(is_ragged))
    def _():
        accumulate(False)

    @pl.when(is_ragged)
    def _():
        accumulate(True)


def _sse_pallas(yhat2d, y2d, rows, num_splits, max_block_rows):
    itemsize = max(jnp.dtype(yhat2d.dtype).itemsize, jnp.dtype(y2d.dtype).itemsize)
    block_rows, chunk_rows = _pick_block_rows(rows, num_splits, itemsize, max_block_rows)
    total_blocks = pl.cdiv(rows, block_rows)
    inner_steps = pl.cdiv(total_blocks, num_splits)
    last_block = total_blocks - 1

    def in_map(c, i):
        # Clamp so a fully-out-of-range step (odd block count with two core
        # splits) re-reads the last block; the in-kernel mask (computed from the
        # un-clamped index) zeroes its contribution.
        return (jnp.minimum(c * inner_steps + i, last_block), 0)

    kernel = functools.partial(
        _sse_kernel, block_rows=block_rows, chunk_rows=chunk_rows,
        inner_steps=inner_steps, rows=rows)

    partials = pl.pallas_call(
        kernel,
        out_shape=jax.ShapeDtypeStruct((num_splits, _SUBLANES, _LANES), jnp.float32),
        grid_spec=pltpu.PrefetchScalarGridSpec(
            num_scalar_prefetch=0,
            grid=(num_splits, inner_steps),
            in_specs=[
                pl.BlockSpec((block_rows, _LANES), in_map),
                pl.BlockSpec((block_rows, _LANES), in_map),
            ],
            out_specs=pl.BlockSpec((1, _SUBLANES, _LANES), lambda c, i: (c, 0, 0)),
        ),
        compiler_params=pltpu.CompilerParams(
            dimension_semantics=("parallel", "arbitrary"),
            vmem_limit_bytes=_VMEM_LIMIT_BYTES,
        ),
    )(yhat2d, y2d)
    return jnp.sum(partials)  # tiny (splits*8*128) reduce in plain XLA


def rmse_loss(yhat, y, eps=1e-6, *, max_block_rows=None):
    """RMSE loss: sqrt(mean((yhat - y)**2) + eps), matching the PyTorch module."""
    assert yhat.shape == y.shape, "yhat and y must have the same shape"
    n_elems = yhat.size
    assert n_elems > 0

    # Flatten (free for contiguous arrays). No wrapper-side upcast: the kernel
    # casts after load, so bf16 inputs stream at half the bytes.
    flat_yhat = jnp.ravel(yhat)
    flat_y = jnp.ravel(y)

    aligned = (n_elems // _ALIGN) * _ALIGN
    num_splits = _num_core_splits()

    sse = jnp.float32(0.0)
    if aligned:
        rows = aligned // _LANES
        if aligned == n_elems:
            yh2d = flat_yhat.reshape(rows, _LANES)
            y2d = flat_y.reshape(rows, _LANES)
        else:
            # TODO(synk): for sizes not a multiple of 1024 this prefix slice may
            # materialize one copy of each input; element-level in-kernel masking
            # over a 1-D layout would remove it if that case ever matters.
            yh2d = flat_yhat[:aligned].reshape(rows, _LANES)
            y2d = flat_y[:aligned].reshape(rows, _LANES)
        sse = sse + _sse_pallas(yh2d, y2d, rows, num_splits, max_block_rows)
    if aligned != n_elems:
        # <=1023-element unaligned tail: negligible work, do it in plain XLA.
        d_tail = (flat_yhat[aligned:].astype(jnp.float32)
                  - flat_y[aligned:].astype(jnp.float32))
        sse = sse + jnp.sum(d_tail * d_tail)

    return jnp.sqrt(sse / jnp.float32(n_elems) + jnp.float32(eps))


def _check(shape, key, eps=1e-6, dtype=jnp.float32, max_block_rows=None):
    k1, k2 = jax.random.split(key)
    yhat = jax.random.normal(k1, shape, dtype=jnp.float32).astype(dtype)
    y = jax.random.normal(k2, shape, dtype=jnp.float32).astype(dtype)
    loss = rmse_loss(yhat, y, eps, max_block_rows=max_block_rows)
    jax.block_until_ready(loss)
    d = yhat.astype(jnp.float32) - y.astype(jnp.float32)
    ref = jnp.sqrt(jnp.mean(d * d) + eps)
    assert jnp.allclose(loss, ref, rtol=1e-5, atol=1e-6), (shape, dtype, loss, ref)


if __name__ == "__main__":
    key = jax.random.PRNGKey(0)
    k1, k2, k3, k4 = jax.random.split(key, 4)

    # Primary check: small NCHW-style inputs (batch=2, channels=4, 16x16).
    _check((2, 4, 16, 16), k1)

    # Size not a multiple of 1024: kernel runs on the aligned prefix, the
    # 131-element tail is summed in plain XLA (no jnp.pad copies).
    _check((3, 5, 7, 11), k2)

    # Multi-block grid with a ragged, in-kernel-masked last block.
    _check((3, 8, 128), k3, max_block_rows=16)

    # bf16 inputs (kernel casts to f32 after load, dtype-aware tiling path).
    _check((2, 4, 16, 16), k4, dtype=jnp.bfloat16)

    print("KERNEL_OK")
</pallas_src>

<mosaic_0001>
module attributes {stable_mosaic.version = 11 : i64} {
  func.func @_sse_kernel(%arg0: i32, %arg1: i32, %arg2: memref<16x128xf32, #tpu.memory_space<vmem>>, %arg3: memref<16x128xf32, #tpu.memory_space<vmem>>, %arg4: memref<1x8x128xf32, #tpu.memory_space<vmem>>) attributes {dimension_semantics = [#tpu.dimension_semantics<parallel>, #tpu.dimension_semantics<arbitrary>], iteration_bounds = array<i64: 1, 1>, scalar_prefetch = 0 : i64, scratch_operands = 0 : i64, tpu.core_type = #tpu.core_type<tc>, window_params = [{transform_indices = @transform_0, window_bounds = array<i64: 16, 128>}, {transform_indices = @transform_1, window_bounds = array<i64: 16, 128>}, {transform_indices = @transform_2, window_bounds = array<i64: 1, 8, 128>}]} {
    %c0_i32 = arith.constant 0 : i32
    %0 = arith.cmpi eq, %arg1, %c0_i32 : i32
    %1 = arith.extui %0 : i1 to i32
    %c0_i32_0 = arith.constant 0 : i32
    %2 = arith.cmpi ne, %1, %c0_i32_0 : i32
    scf.if %2 {
      %cst = arith.constant 0.000000e+00 : f32
      %13 = vector.broadcast %cst : f32 to vector<1x8x128xf32>
      %c0 = arith.constant 0 : index
      %c0_5 = arith.constant 0 : index
      %c0_6 = arith.constant 0 : index
      %14 = vector.load %arg4[%c0, %c0_5, %c0_6] : memref<1x8x128xf32, #tpu.memory_space<vmem>>, vector<1x8x128xf32>
      tpu.vector_store %arg4[%c0, %c0_5, %c0_6], %13 {strides = array<i32>} : memref<1x8x128xf32, #tpu.memory_space<vmem>>, vector<1x8x128xf32>,
    } else {
    }
    %c1_i32 = arith.constant 1 : i32
    %3 = arith.muli %arg0, %c1_i32 : i32
    %4 = arith.addi %3, %arg1 : i32
    %c16_i32 = arith.constant 16 : i32
    %5 = arith.muli %4, %c16_i32 : i32
    %c16_i32_1 = arith.constant 16 : i32
    %6 = arith.addi %5, %c16_i32_1 : i32
    %c16_i32_2 = arith.constant 16 : i32
    %7 = arith.cmpi sgt, %6, %c16_i32_2 : i32
    %true = arith.constant true
    %8 = arith.xori %7, %true : i1
    %9 = arith.extui %8 : i1 to i32
    %c0_i32_3 = arith.constant 0 : i32
    %10 = arith.cmpi ne, %9, %c0_i32_3 : i32
    scf.if %10 {
      %cst = arith.constant 0.000000e+00 : f32
      %13 = vector.broadcast %cst : f32 to vector<8x128xf32>
      %c0_i32_5 = arith.constant 0 : i32
      %c16_i32_6 = arith.constant 16 : i32
      %14 = arith.muli %c0_i32_5, %c16_i32_6 : i32
      %15 = tpu.assume_multiple %14, 8 : i32
      %16 = arith.index_cast %15 : i32 to index
      %c0 = arith.constant 0 : index
      %17 = vector.load %arg2[%16, %c0] : memref<16x128xf32, #tpu.memory_space<vmem>>, vector<16x128xf32>
      %18 = arith.index_cast %15 : i32 to index
      %c0_7 = arith.constant 0 : index
      %19 = vector.load %arg3[%18, %c0_7] : memref<16x128xf32, #tpu.memory_space<vmem>>, vector<16x128xf32>
      %20 = arith.subf %17, %19 : vector<16x128xf32>
      %21 = arith.mulf %20, %20 : vector<16x128xf32>
      %22 = vector.shape_cast %21 : vector<16x128xf32> to vector<2x8x128xf32>
      %cst_8 = arith.constant dense<0.000000e+00> : vector<8x128xf32>
      %23 = vector.multi_reduction <add>, %22, %cst_8 [0] : vector<2x8x128xf32> to vector<8x128xf32>
      %24 = arith.addf %13, %23 : vector<8x128xf32>
      %c1_i32_9 = arith.constant 1 : i32
      %c0_10 = arith.constant 0 : index
      %c0_11 = arith.constant 0 : index
      %c0_12 = arith.constant 0 : index
      %25 = vector.load %arg4[%c0_10, %c0_11, %c0_12] : memref<1x8x128xf32, #tpu.memory_space<vmem>>, vector<1x8x128xf32>
      %26 = vector.shape_cast %24 : vector<8x128xf32> to vector<1x8x128xf32>
      %27 = arith.addf %25, %26 : vector<1x8x128xf32>
      %c0_13 = arith.constant 0 : index
      %c0_14 = arith.constant 0 : index
      %c0_15 = arith.constant 0 : index
      %28 = vector.load %arg4[%c0_13, %c0_14, %c0_15] : memref<1x8x128xf32, #tpu.memory_space<vmem>>, vector<1x8x128xf32>
      tpu.vector_store %arg4[%c0_13, %c0_14, %c0_15], %27 {strides = array<i32>} : memref<1x8x128xf32, #tpu.memory_space<vmem>>, vector<1x8x128xf32>,
    } else {
    }
    %11 = arith.extui %7 : i1 to i32
    %c0_i32_4 = arith.constant 0 : i32
    %12 = arith.cmpi ne, %11, %c0_i32_4 : i32
    scf.if %12 {
      %cst = arith.constant 0.000000e+00 : f32
      %13 = vector.broadcast %cst : f32 to vector<8x128xf32>
      %c0_i32_5 = arith.constant 0 : i32
      %c16_i32_6 = arith.constant 16 : i32
      %14 = arith.muli %c0_i32_5, %c16_i32_6 : i32
      %15 = tpu.assume_multiple %14, 8 : i32
      %16 = arith.index_cast %15 : i32 to index
      %c0 = arith.constant 0 : index
      %17 = vector.load %arg2[%16, %c0] : memref<16x128xf32, #tpu.memory_space<vmem>>, vector<16x128xf32>
      %18 = arith.index_cast %15 : i32 to index
      %c0_7 = arith.constant 0 : index
      %19 = vector.load %arg3[%18, %c0_7] : memref<16x128xf32, #tpu.memory_space<vmem>>, vector<16x128xf32>
      %20 = arith.subf %17, %19 : vector<16x128xf32>
      %21 = arith.mulf %20, %20 : vector<16x128xf32>
      %22 = tpu.iota {dimensions = array<i32: 0>} : vector<16x128xi32>
      %23 = arith.addi %5, %15 : i32
      %24 = vector.broadcast %23 : i32 to vector<16x128xi32>
      %25 = arith.addi %24, %22 : vector<16x128xi32>
      %c16_i32_8 = arith.constant 16 : i32
      %26 = vector.broadcast %c16_i32_8 : i32 to vector<16x128xi32>
      %27 = arith.cmpi slt, %25, %26 : vector<16x128xi32>
      %cst_9 = arith.constant 0.000000e+00 : f32
      %28 = vector.broadcast %cst_9 : f32 to vector<16x128xf32>
      %29 = arith.select %27, %21, %28 : vector<16x128xi1>, vector<16x128xf32>
      %30 = vector.shape_cast %29 : vector<16x128xf32> to vector<2x8x128xf32>
      %cst_10 = arith.constant dense<0.000000e+00> : vector<8x128xf32>
      %31 = vector.multi_reduction <add>, %30, %cst_10 [0] : vector<2x8x128xf32> to vector<8x128xf32>
      %32 = arith.addf %13, %31 : vector<8x128xf32>
      %c1_i32_11 = arith.constant 1 : i32
      %c0_12 = arith.constant 0 : index
      %c0_13 = arith.constant 0 : index
      %c0_14 = arith.constant 0 : index
      %33 = vector.load %arg4[%c0_12, %c0_13, %c0_14] : memref<1x8x128xf32, #tpu.memory_space<vmem>>, vector<1x8x128xf32>
      %34 = vector.shape_cast %32 : vector<8x128xf32> to vector<1x8x128xf32>
      %35 = arith.addf %33, %34 : vector<1x8x128xf32>
      %c0_15 = arith.constant 0 : index
      %c0_16 = arith.constant 0 : index
      %c0_17 = arith.constant 0 : index
      %36 = vector.load %arg4[%c0_15, %c0_16, %c0_17] : memref<1x8x128xf32, #tpu.memory_space<vmem>>, vector<1x8x128xf32>
      tpu.vector_store %arg4[%c0_15, %c0_16, %c0_17], %35 {strides = array<i32>} : memref<1x8x128xf32, #tpu.memory_space<vmem>>, vector<1x8x128xf32>,
    } else {
    }
    return
  }
  func.func @transform_0(%arg0: i32, %arg1: i32) -> (i32, i32) {
    %c1_i32 = arith.constant 1 : i32
    %0 = arith.muli %arg0, %c1_i32 : i32
    %1 = arith.addi %0, %arg1 : i32
    %c0_i32 = arith.constant 0 : i32
    %2 = arith.minsi %1, %c0_i32 : i32
    %c0_i32_0 = arith.constant 0 : i32
    %c0_i32_1 = arith.constant 0 : i32
    return %2, %c0_i32_0 : i32, i32
  }
  func.func @transform_1(%arg0: i32, %arg1: i32) -> (i32, i32) {
    %c1_i32 = arith.constant 1 : i32
    %0 = arith.muli %arg0, %c1_i32 : i32
    %1 = arith.addi %0, %arg1 : i32
    %c0_i32 = arith.constant 0 : i32
    %2 = arith.minsi %1, %c0_i32 : i32
    %c0_i32_0 = arith.constant 0 : i32
    %c0_i32_1 = arith.constant 0 : i32
    return %2, %c0_i32_0 : i32, i32
  }
  func.func @transform_2(%arg0: i32, %arg1: i32) -> (i32, i32, i32) {
    %c0_i32 = arith.constant 0 : i32
    %c0_i32_0 = arith.constant 0 : i32
    %c0_i32_1 = arith.constant 0 : i32
    return %arg0, %c0_i32, %c0_i32_0 : i32, i32, i32
  }
}

</mosaic_0001>

<llo_original>
// kernel: tpu_custom_call.1
$region0: #{tpu_custom_call.1}
  #allocation0 [shape = 'u32[]', space=smem, size = 0x4, offset = 0x4, fixed_abs, tag = 'smem constant byte address 0x4 - core index']
  #allocation1 [shape = 'u32[144,128]{1,0:T(1,128)}', space=vmem, size = 0x12000, scoped, tag = 'internal scratch']
  %s0 = inlined_call_operand.hbm [shape: f32[16,128], index: 0, kind: input, shape index: {}]
  %s1 = inlined_call_operand.hbm [shape: f32[16,128], index: 1, kind: input, shape index: {}]
  %s2 = inlined_call_operand.hbm [shape: f32[1,8,128], index: 2, kind: output, shape index: {}]
  %s3 = sld [smem:[#allocation0]]
  $region38: #{tpu_custom_call.1} parent=0
    _
  %s5 = ssub.s32 1, %s3
  %s6 = scalar_select 0, %s5, %s3
  $region1: #{tpu_custom_call.1} parent=0
    #allocation2 [shape = 'u8[8192]{0}', space=vmem, size = 0x2000, scoped, tag = 'input window, operand 0, single buffered']
    #allocation3 [shape = 's32[1]{0}', space=sflag, size = 0x4, scoped, tag = 'scoped memory for tpu_custom_call.1']
    #allocation4 [shape = 's32[1]{0}', space=sflag, size = 0x4, scoped, tag = 'scoped memory for tpu_custom_call.1']
    #allocation5 [shape = 'u8[8192]{0}', space=vmem, size = 0x2000, scoped, tag = 'input window, operand 1, single buffered']
    #allocation6 [shape = 's32[1]{0}', space=sflag, size = 0x4, scoped, tag = 'scoped memory for tpu_custom_call.1']
    #allocation7 [shape = 'u8[4096]{0}', space=vmem, size = 0x1000, scoped, tag = 'output window, operand 0, single buffered']
    %7 = vsyncpa [#allocation3], 0
    %8 = vsyncpa [#allocation6], 0
    %9 = vsyncpa [#allocation4], 0
    // Predicated region
    $region2: #{tpu_custom_call.1} parent=1 // pred_check
      _
    $region3: #{tpu_custom_call.1} parent=1 // pred_check_branch
      %11 = sbr.rel (0) target = $region5
    $region4: #{tpu_custom_call.1} parent=1 // pred_region
      %s12 = sadd.s32 0, 0
      %p13 = scmp.lt.s32.totalorder %s12, 0
      %s14 = scalar_select %p13, %s12, 0
      %s15 = smul.u32 2, %s14
      %s17 = ssub.s32 256, 256
      %18 = vsyncadd [#allocation3], %s17
      %s19 = smul.addr %s15, 128
      %s20 = scalar_lea.hbm %s0, %s19
      %s21 = sshll.u32 [#allocation2], 4
      %s22 = int_to_ptr.vmem [resolvable:$true] %s21
      %27 = dma.hbm_to_vmem [thread:$0]  %s20, 256, %s22, [#allocation3], 128, 128, 8
    $region5: #{tpu_custom_call.1} parent=1 // pred_fallthru
      _
    // Predicated region
    $region6: #{tpu_custom_call.1} parent=1 // pred_check
      _
    $region7: #{tpu_custom_call.1} parent=1 // pred_check_branch
      %29 = sbr.rel (0) target = $region9
    $region8: #{tpu_custom_call.1} parent=1 // pred_region
      %s30 = sadd.s32 0, 0
      %p31 = scmp.lt.s32.totalorder %s30, 0
      %s32 = scalar_select %p31, %s30, 0
      %s33 = smul.u32 2, %s32
      %s35 = ssub.s32 256, 256
      %36 = vsyncadd [#allocation6], %s35
      %s37 = smul.addr %s33, 128
      %s38 = scalar_lea.hbm %s1, %s37
      %s39 = sshll.u32 [#allocation5], 4
      %s40 = int_to_ptr.vmem [resolvable:$true] %s39
      %45 = dma.hbm_to_vmem [thread:$0]  %s38, 256, %s40, [#allocation6], 128, 128, 8
    $region9: #{tpu_custom_call.1} parent=1 // pred_fallthru
      _
    // Predicated region
    $region10: #{tpu_custom_call.1} parent=1 // pred_check
      _
    $region11: #{tpu_custom_call.1} parent=1 // pred_check_branch
      %47 = sbr.rel (0) target = $region13
    $region12: #{tpu_custom_call.1} parent=1 // pred_region
      %48 = dma.done [#allocation3], 256
    $region13: #{tpu_custom_call.1} parent=1 // pred_fallthru
      _
    // Predicated region
    $region14: #{tpu_custom_call.1} parent=1 // pred_check
      _
    $region15: #{tpu_custom_call.1} parent=1 // pred_check_branch
      %50 = sbr.rel (0) target = $region17
    $region16: #{tpu_custom_call.1} parent=1 // pred_region
      %51 = dma.done [#allocation6], 256
    $region17: #{tpu_custom_call.1} parent=1 // pred_fallthru
      _
    %s52 = sadd.s32 0, 0
    %p53 = scmp.lt.s32.totalorder %s52, 0
    %s54 = scalar_select %p53, %s52, 0
    %s55 = smul.u32 2, %s54
    %s56 = sadd.s32 0, 0
    %p57 = scmp.lt.s32.totalorder %s56, 0
    %s58 = scalar_select %p57, %s56, 0
    %s59 = smul.u32 2, %s58
    %p60 = scmp.eq.s32.totalorder 0, 0
    // Predicated region
    $region18: #{tpu_custom_call.1} parent=1 // pred_check
      %p61 = pneg %p60
    $region19: #{tpu_custom_call.1} parent=1 // pred_check_branch
      %63 = sbr.rel (%p61) target = $region21
    $region20: #{tpu_custom_call.1} parent=1 // pred_region
      %64 = vst [vmem:[#allocation7] sm:$0xff] 0.0
    $region21: #{tpu_custom_call.1} parent=1 // pred_fallthru
      _
    %s65 = sadd.s32 0, 0
    %s66 = smul.u32 %s65, 16
    %s67 = sadd.s32 %s66, 16
    %p68 = scmp.gt.s32.totalorder %s67, 16
    %p69 = scmp.le.s32.totalorder %s67, 16
    // Predicated region
    $region22: #{tpu_custom_call.1} parent=1 // pred_check
      %p70 = pneg %p69
    $region23: #{tpu_custom_call.1} parent=1 // pred_check_branch
      %72 = sbr.rel (%p70) target = $region25
    $region24: #{tpu_custom_call.1} parent=1 // pred_region
      %v73 = vld [vmem:[#allocation2] sm:$0xff]
      %v74 = vld [vmem:[#allocation2 + $0x8] sm:$0xff]
      %v75 = vld [vmem:[#allocation5] sm:$0xff]
      %v76 = vld [vmem:[#allocation5 + $0x8] sm:$0xff]
      %v77 = vsub.f32 %v73, %v75
      %v78 = vsub.f32 %v74, %v76
      %v79 = vmul.f32 %v77, %v77
      %v80 = vmul.f32 %v78, %v78
      %v81 = vadd.f32 %v79, %v80
      %v82 = vadd.f32 %v81, 0.0
      %v83 = vld [vmem:[#allocation7] sm:$0xff]
      %v84 = vadd.f32 %v83, %v82
      %85 = vst [vmem:[#allocation7] sm:$0xff] %v84
    $region25: #{tpu_custom_call.1} parent=1 // pred_fallthru
      _
    // Predicated region
    $region26: #{tpu_custom_call.1} parent=1 // pred_check
      %p86 = pneg %p68
    $region27: #{tpu_custom_call.1} parent=1 // pred_check_branch
      %88 = sbr.rel (%p86) target = $region29
    $region28: #{tpu_custom_call.1} parent=1 // pred_region
      %v89 = vld [vmem:[#allocation2] sm:$0xff]
      %v90 = vld [vmem:[#allocation2 + $0x8] sm:$0xff]
      %v91 = vld [vmem:[#allocation5] sm:$0xff]
      %v92 = vld [vmem:[#allocation5 + $0x8] sm:$0xff]
      %v93 = vsub.f32 %v89, %v91
      %v94 = vsub.f32 %v90, %v92
      %v95 = vmul.f32 %v93, %v93
      %v96 = vmul.f32 %v94, %v94
      %v97 = vlaneseq
      %v98 = vshrl.u32 %v97, 7
      %v99 = vadd.s32 %v98, 8
      %s100 = sadd.s32 %s66, 0
      %v101 = vstv %s100
      %v102 = vadd.s32 %v101, %v98
      %v103 = vadd.s32 %v101, %v99
      %vm104 = vcmp.lt.s32.totalorder %v102, 16
      %vm105 = vcmp.lt.s32.totalorder %v103, 16
      %v106 = vsel %vm104, %v95, 0.0
      %v107 = vsel %vm105, %v96, 0.0
      %v108 = vadd.f32 %v106, %v107
      %v109 = vadd.f32 %v108, 0.0
      %v110 = vld [vmem:[#allocation7] sm:$0xff]
      %v111 = vadd.f32 %v110, %v109
      %112 = vst [vmem:[#allocation7] sm:$0xff] %v111
    $region29: #{tpu_custom_call.1} parent=1 // pred_fallthru
      _
    // Predicated region
    $region30: #{tpu_custom_call.1} parent=1 // pred_check
      _
    $region31: #{tpu_custom_call.1} parent=1 // pred_check_branch
      %114 = sbr.rel (0) target = $region33
    $region32: #{tpu_custom_call.1} parent=1 // pred_region
      %s116 = ssub.s32 128, 128
      %117 = vsyncadd [#allocation4], %s116
      %s119 = sshll.u32 [#allocation7], 4
      %s120 = int_to_ptr.vmem [resolvable:$true] %s119
      %122 = dma.vmem_to_hbm [thread:$0]  %s120, 128, %s2, [#allocation4]
    $region33: #{tpu_custom_call.1} parent=1 // pred_fallthru
      _
    // Predicated region
    $region34: #{tpu_custom_call.1} parent=1 // pred_check
      _
    $region35: #{tpu_custom_call.1} parent=1 // pred_check_branch
      %124 = sbr.rel (0) target = $region37
    $region36: #{tpu_custom_call.1} parent=1 // pred_region
      %125 = dma.done [#allocation4], 128
    $region37: #{tpu_custom_call.1} parent=1 // pred_fallthru
      _
    %126 = vsyncpa [#allocation3], 1
    %127 = vsyncpa [#allocation6], 1
    %128 = vsyncpa [#allocation4], 1

</llo_original>
